<compile_context>
chip_gen: v5e
topology: v5e:2x2
jax: 0.10.0
libtpu: 0.0.40
codegen_flags: <defaults>
</compile_context>

<pallas_src>
import functools

import jax
import jax.numpy as jnp
import numpy as np
from jax.experimental import pallas as pl
from jax.experimental.pallas import tpu as pltpu


def _resnet_block_kernel(x_ref, a1_ref, b1_ref, a2_ref, b2_ref, as_ref, bs_ref,
                         o_ref, *, stride):
    """One NB-image block per grid step; W*C-packed lane layout.

    x_ref  : (NB, H, W*Cin)   f32    packed input images
    a1_ref : (3, W*Cin, W*Cin)       bf16  conv1 banded matrices (one per kh)
    b1_ref : (1, W*Cin)       f32    conv1 bias tiled over W
    a2_ref : (3, W*Cin, Wout*Cout)   bf16  conv2 banded matrices
    b2_ref : (1, Wout*Cout)   f32
    as_ref : (W*Cin, Wout*Cout)      bf16  1x1 skip banded matrix
    bs_ref : (1, Wout*Cout)   f32
    o_ref  : (NB, Hout, Wout*Cout)   packed output (lane-dense last dim)
    """
    nb, H, WCin = x_ref.shape
    _, Hout, _ = o_ref.shape

    a1 = a1_ref[...]
    a2 = a2_ref[...]
    a_s = as_ref[...]
    b1 = b1_ref[...]
    b2 = b2_ref[...]
    bs = bs_ref[...]

    zrow = jnp.zeros((1, WCin), jnp.bfloat16)

    def conv3x3(src_ext, a, s, n_out):
        # src_ext: (H+2, W*Cin) bf16 with one zero halo row top/bottom.
        # Row taps are static (possibly strided) slices; kw/channel contraction is
        # already folded into the banded matrices a[kh].
        e = s * (n_out - 1) + 1
        acc = jnp.dot(src_ext[0:e:s], a[0], preferred_element_type=jnp.float32)
        acc = acc + jnp.dot(src_ext[1:1 + e:s], a[1],
                            preferred_element_type=jnp.float32)
        acc = acc + jnp.dot(src_ext[2:2 + e:s], a[2],
                            preferred_element_type=jnp.float32)
        return acc

    for n in range(nb):
        xb = x_ref[n].astype(jnp.bfloat16)                       # (H, W*Cin)
        xe = jnp.concatenate([zrow, xb, zrow], axis=0)           # (H+2, W*Cin)

        # conv1: 3x3, stride 1, Cin -> Cin, ReLU
        y1 = jnp.maximum(conv3x3(xe, a1, 1, H) + b1, 0.0)        # (H, W*Cin) f32
        y1e = jnp.concatenate([zrow, y1.astype(jnp.bfloat16), zrow], axis=0)

        # conv2: 3x3, stride s, Cin -> Cout, ReLU
        y2 = jnp.maximum(conv3x3(y1e, a2, stride, Hout) + b2, 0.0)   # (Hout, Wout*Cout)

        # skip: 1x1 conv, stride s, on the already-cast packed x (center rows)
        skip = jnp.dot(xb[0:stride * (Hout - 1) + 1:stride], a_s,
                       preferred_element_type=jnp.float32) + bs

        o_ref[n] = (y2 + skip).astype(o_ref.dtype)


def _band_matrix_3x3(w_hwio, w_in, w_out, stride):
    """Fold the kw taps + channel contraction of a 3x3 conv into 3 banded matrices.

    w_hwio: (3, 3, Ci, Co).  Returns (3, w_in*Ci, w_out*Co) with
    A[kh, wi*Ci + ci, wo*Co + co] = w[kh, kw, ci, co] where wi = wo*stride + kw - 1;
    taps falling in the zero-padded columns are simply dropped (they contribute 0).
    """
    _, _, ci, co = w_hwio.shape
    sel = np.zeros((3, w_in, w_out), np.float32)
    for kw in range(3):
        for wo in range(w_out):
            wi = wo * stride + kw - 1
            if 0 <= wi < w_in:
                sel[kw, wi, wo] = 1.0
    a = jnp.einsum("kwv,hkio->hwivo", jnp.asarray(sel), w_hwio)
    return a.reshape(3, w_in * ci, w_out * co)


def _band_matrix_1x1(ws, w_in, w_out, stride):
    """1x1 conv (stride s) as a single banded matrix (w_in*Ci, w_out*Co)."""
    ci, co = ws.shape
    sel = np.zeros((w_in, w_out), np.float32)
    for wo in range(w_out):
        sel[wo * stride, wo] = 1.0
    return jnp.einsum("wv,io->wivo", jnp.asarray(sel), ws).reshape(w_in * ci, w_out * co)


def _pick_batch_block(n):
    # Amortize per-step overhead for large N, but keep >=4 grid steps so the software
    # pipeline (and both v7x TensorCores) stay busy. For tiny N this returns 1.
    for nb in (8, 4, 2):
        if n % nb == 0 and n // nb >= 4:
            return nb
    return 1


def resnet_block_change(x_nchw, params, downscale=False):
    """Pallas forward. x_nchw: (N, Cin, H, W) float32 -> (N, Cout, Hout, Wout)."""
    s = 2 if downscale else 1
    N, Cin, H, W = x_nchw.shape
    Cout = params["w2"].shape[-1]
    Hout = (H - 1) // s + 1
    Wout = (W - 1) // s + 1

    # NCHW -> W*Cin-packed lane layout (glue; same memory order as NHWC).
    x = jnp.transpose(x_nchw, (0, 2, 3, 1)).reshape(N, H, W * Cin)

    # Banded weight matrices (kw taps + channel contraction folded in), stored bf16.
    a1 = _band_matrix_3x3(params["w1"], W, W, 1).astype(jnp.bfloat16)       # (3, W*Cin, W*Cin)
    a2 = _band_matrix_3x3(params["w2"], W, Wout, s).astype(jnp.bfloat16)    # (3, W*Cin, Wout*Cout)
    a_s = _band_matrix_1x1(params["ws"], W, Wout, s).astype(jnp.bfloat16)   # (W*Cin, Wout*Cout)
    b1p = jnp.tile(params["b1"], W).reshape(1, W * Cin)
    b2p = jnp.tile(params["b2"], Wout).reshape(1, Wout * Cout)
    bsp = jnp.tile(params["bs"], Wout).reshape(1, Wout * Cout)

    nb = _pick_batch_block(N)
    kernel = functools.partial(_resnet_block_kernel, stride=s)

    out_packed = pl.pallas_call(
        kernel,
        grid=(N // nb,),
        out_shape=jax.ShapeDtypeStruct((N, Hout, Wout * Cout), x.dtype),
        in_specs=[
            pl.BlockSpec((nb, H, W * Cin), lambda g: (g, 0, 0)),             # x block
            pl.BlockSpec((3, W * Cin, W * Cin), lambda g: (0, 0, 0)),        # a1 (resident)
            pl.BlockSpec((1, W * Cin), lambda g: (0, 0)),                    # b1
            pl.BlockSpec((3, W * Cin, Wout * Cout), lambda g: (0, 0, 0)),    # a2
            pl.BlockSpec((1, Wout * Cout), lambda g: (0, 0)),                # b2
            pl.BlockSpec((W * Cin, Wout * Cout), lambda g: (0, 0)),          # a_s
            pl.BlockSpec((1, Wout * Cout), lambda g: (0, 0)),                # bs
        ],
        out_specs=pl.BlockSpec((nb, Hout, Wout * Cout), lambda g: (g, 0, 0)),  # lane-dense
        compiler_params=pltpu.CompilerParams(
            dimension_semantics=("parallel",),     # batch axis -> megacore split
        ),
    )(x, a1, b1p, a2, b2p, a_s, bsp)

    out = out_packed.reshape(N, Hout, Wout, Cout)
    return jnp.transpose(out, (0, 3, 1, 2))        # packed NHWC -> NCHW (glue)


def reference_forward(x_nchw, params, downscale=False):
    """Pure-JAX reference (matches PyTorch nn.Conv2d semantics, f32)."""
    s = 2 if downscale else 1
    dn = ("NHWC", "HWIO", "NHWC")
    prec = jax.lax.Precision.HIGHEST
    x = jnp.transpose(x_nchw, (0, 2, 3, 1))
    y = jax.lax.conv_general_dilated(x, params["w1"], (1, 1), ((1, 1), (1, 1)),
                                     dimension_numbers=dn, precision=prec) + params["b1"]
    y = jnp.maximum(y, 0.0)
    y = jax.lax.conv_general_dilated(y, params["w2"], (s, s), ((1, 1), (1, 1)),
                                     dimension_numbers=dn, precision=prec) + params["b2"]
    y = jnp.maximum(y, 0.0)
    skip = jax.lax.conv_general_dilated(x, params["ws"][None, None], (s, s), "VALID",
                                        dimension_numbers=dn, precision=prec) + params["bs"]
    return jnp.transpose(y + skip, (0, 3, 1, 2))


def init_params(key, inp, out):
    k1, k2, k3, k4, k5, k6 = jax.random.split(key, 6)
    return {
        # conv weights stored HWIO (kh, kw, Cin, Cout)
        "w1": 0.1 * jax.random.normal(k1, (3, 3, inp, inp), jnp.float32),
        "b1": 0.1 * jax.random.normal(k2, (inp,), jnp.float32),
        "w2": 0.1 * jax.random.normal(k3, (3, 3, inp, out), jnp.float32),
        "b2": 0.1 * jax.random.normal(k4, (out,), jnp.float32),
        "ws": 0.1 * jax.random.normal(k5, (inp, out), jnp.float32),
        "bs": 0.1 * jax.random.normal(k6, (out,), jnp.float32),
    }


if __name__ == "__main__":
    key = jax.random.PRNGKey(0)
    kx, kp = jax.random.split(key)

    N, Cin, H, W = 2, 4, 16, 16
    Cout = 8
    downscale = False  # stride 1

    x = jax.random.normal(kx, (N, Cin, H, W), jnp.float32)
    params = init_params(kp, Cin, Cout)

    out = resnet_block_change(x, params, downscale=downscale)
    out = jax.block_until_ready(out)

    ref = jax.block_until_ready(reference_forward(x, params, downscale=downscale))
    assert out.shape == ref.shape, (out.shape, ref.shape)
    # Kernel uses bf16 MXU passes with f32 accumulation -> bf16-class tolerance vs f32 ref.
    np.testing.assert_allclose(np.asarray(out), np.asarray(ref), rtol=2e-2, atol=2e-2)

    print("KERNEL_OK")
</pallas_src>

<mosaic_0001>
module attributes {stable_mosaic.version = 11 : i64} {
  func.func @_resnet_block_kernel(%arg0: i32, %arg1: memref<1x16x64xf32, #tpu.memory_space<vmem>>, %arg2: memref<3x64x64xbf16, #tpu.memory_space<vmem>>, %arg3: memref<1x64xf32, #tpu.memory_space<vmem>>, %arg4: memref<3x64x128xbf16, #tpu.memory_space<vmem>>, %arg5: memref<1x128xf32, #tpu.memory_space<vmem>>, %arg6: memref<64x128xbf16, #tpu.memory_space<vmem>>, %arg7: memref<1x128xf32, #tpu.memory_space<vmem>>, %arg8: memref<1x16x128xf32, #tpu.memory_space<vmem>>) attributes {dimension_semantics = [#tpu.dimension_semantics<parallel>], iteration_bounds = array<i64: 2>, scalar_prefetch = 0 : i64, scratch_operands = 0 : i64, tpu.core_type = #tpu.core_type<tc>, window_params = [{transform_indices = @transform_0, window_bounds = array<i64: 1, 16, 64>}, {pipeline_mode = #tpu.pipeline_mode<synchronous>, transform_indices = @transform_1, window_bounds = array<i64: 3, 64, 64>}, {pipeline_mode = #tpu.pipeline_mode<synchronous>, transform_indices = @transform_2, window_bounds = array<i64: 1, 64>}, {pipeline_mode = #tpu.pipeline_mode<synchronous>, transform_indices = @transform_3, window_bounds = array<i64: 3, 64, 128>}, {pipeline_mode = #tpu.pipeline_mode<synchronous>, transform_indices = @transform_4, window_bounds = array<i64: 1, 128>}, {pipeline_mode = #tpu.pipeline_mode<synchronous>, transform_indices = @transform_5, window_bounds = array<i64: 64, 128>}, {pipeline_mode = #tpu.pipeline_mode<synchronous>, transform_indices = @transform_6, window_bounds = array<i64: 1, 128>}, {transform_indices = @transform_7, window_bounds = array<i64: 1, 16, 128>}]} {
    %c0 = arith.constant 0 : index
    %c0_0 = arith.constant 0 : index
    %c0_1 = arith.constant 0 : index
    %0 = vector.load %arg2[%c0, %c0_0, %c0_1] : memref<3x64x64xbf16, #tpu.memory_space<vmem>>, vector<3x64x64xbf16>
    %c0_2 = arith.constant 0 : index
    %c0_3 = arith.constant 0 : index
    %c0_4 = arith.constant 0 : index
    %1 = vector.load %arg4[%c0_2, %c0_3, %c0_4] : memref<3x64x128xbf16, #tpu.memory_space<vmem>>, vector<3x64x128xbf16>
    %c0_5 = arith.constant 0 : index
    %c0_6 = arith.constant 0 : index
    %2 = vector.load %arg6[%c0_5, %c0_6] : memref<64x128xbf16, #tpu.memory_space<vmem>>, vector<64x128xbf16>
    %c0_7 = arith.constant 0 : index
    %c0_8 = arith.constant 0 : index
    %3 = vector.load %arg3[%c0_7, %c0_8] : memref<1x64xf32, #tpu.memory_space<vmem>>, vector<1x64xf32>
    %c0_9 = arith.constant 0 : index
    %c0_10 = arith.constant 0 : index
    %4 = vector.load %arg5[%c0_9, %c0_10] : memref<1x128xf32, #tpu.memory_space<vmem>>, vector<1x128xf32>
    %c0_11 = arith.constant 0 : index
    %c0_12 = arith.constant 0 : index
    %5 = vector.load %arg7[%c0_11, %c0_12] : memref<1x128xf32, #tpu.memory_space<vmem>>, vector<1x128xf32>
    %cst = arith.constant 0.000000e+00 : bf16
    %6 = vector.broadcast %cst : bf16 to vector<1x64xbf16>
    %c0_13 = arith.constant 0 : index
    %c0_14 = arith.constant 0 : index
    %c0_15 = arith.constant 0 : index
    %7 = vector.load %arg1[%c0_13, %c0_14, %c0_15] : memref<1x16x64xf32, #tpu.memory_space<vmem>>, vector<1x16x64xf32>
    %8 = vector.shape_cast %7 : vector<1x16x64xf32> to vector<16x64xf32>
    %9 = arith.truncf %8 : vector<16x64xf32> to vector<16x64xbf16>
    %10 = tpu.concatenate %6, %9, %6 in 0 : vector<1x64xbf16>, vector<16x64xbf16>, vector<1x64xbf16> -> vector<18x64xbf16>
    %11 = vector.extract_strided_slice %10 {offsets = [0, 0], sizes = [16, 64], strides = [1, 1]} : vector<18x64xbf16> to vector<16x64xbf16>
    %12 = vector.extract_strided_slice %0 {offsets = [0, 0, 0], sizes = [1, 64, 64], strides = [1, 1, 1]} : vector<3x64x64xbf16> to vector<1x64x64xbf16>
    %13 = vector.shape_cast %12 : vector<1x64x64xbf16> to vector<64x64xbf16>
    %cst_16 = arith.constant dense<0.000000e+00> : vector<16x64xf32>
    %14 = tpu.matmul %11, %13, %cst_16 {dimension_numbers = #tpu.dot_dimension_numbers<[1], [0], [0], [1], [0, 0, 1, 1], [], []>} : vector<16x64xbf16>, vector<64x64xbf16>, vector<16x64xf32> -> vector<16x64xf32>
    %15 = vector.extract_strided_slice %10 {offsets = [1, 0], sizes = [16, 64], strides = [1, 1]} : vector<18x64xbf16> to vector<16x64xbf16>
    %16 = vector.extract_strided_slice %0 {offsets = [1, 0, 0], sizes = [1, 64, 64], strides = [1, 1, 1]} : vector<3x64x64xbf16> to vector<1x64x64xbf16>
    %17 = vector.shape_cast %16 : vector<1x64x64xbf16> to vector<64x64xbf16>
    %cst_17 = arith.constant dense<0.000000e+00> : vector<16x64xf32>
    %18 = tpu.matmul %15, %17, %cst_17 {dimension_numbers = #tpu.dot_dimension_numbers<[1], [0], [0], [1], [0, 0, 1, 1], [], []>} : vector<16x64xbf16>, vector<64x64xbf16>, vector<16x64xf32> -> vector<16x64xf32>
    %19 = arith.addf %14, %18 : vector<16x64xf32>
    %20 = vector.extract_strided_slice %10 {offsets = [2, 0], sizes = [16, 64], strides = [1, 1]} : vector<18x64xbf16> to vector<16x64xbf16>
    %21 = vector.extract_strided_slice %0 {offsets = [2, 0, 0], sizes = [1, 64, 64], strides = [1, 1, 1]} : vector<3x64x64xbf16> to vector<1x64x64xbf16>
    %22 = vector.shape_cast %21 : vector<1x64x64xbf16> to vector<64x64xbf16>
    %cst_18 = arith.constant dense<0.000000e+00> : vector<16x64xf32>
    %23 = tpu.matmul %20, %22, %cst_18 {dimension_numbers = #tpu.dot_dimension_numbers<[1], [0], [0], [1], [0, 0, 1, 1], [], []>} : vector<16x64xbf16>, vector<64x64xbf16>, vector<16x64xf32> -> vector<16x64xf32>
    %24 = arith.addf %19, %23 : vector<16x64xf32>
    %25 = vector.broadcast %3 : vector<1x64xf32> to vector<16x64xf32>
    %26 = arith.addf %24, %25 : vector<16x64xf32>
    %cst_19 = arith.constant 0.000000e+00 : f32
    %27 = vector.broadcast %cst_19 : f32 to vector<16x64xf32>
    %28 = arith.maximumf %26, %27 : vector<16x64xf32>
    %29 = arith.truncf %28 : vector<16x64xf32> to vector<16x64xbf16>
    %30 = tpu.concatenate %6, %29, %6 in 0 : vector<1x64xbf16>, vector<16x64xbf16>, vector<1x64xbf16> -> vector<18x64xbf16>
    %31 = vector.extract_strided_slice %30 {offsets = [0, 0], sizes = [16, 64], strides = [1, 1]} : vector<18x64xbf16> to vector<16x64xbf16>
    %32 = vector.extract_strided_slice %1 {offsets = [0, 0, 0], sizes = [1, 64, 128], strides = [1, 1, 1]} : vector<3x64x128xbf16> to vector<1x64x128xbf16>
    %33 = vector.shape_cast %32 : vector<1x64x128xbf16> to vector<64x128xbf16>
    %cst_20 = arith.constant dense<0.000000e+00> : vector<16x128xf32>
    %34 = tpu.matmul %31, %33, %cst_20 {dimension_numbers = #tpu.dot_dimension_numbers<[1], [0], [0], [1], [0, 0, 1, 1], [], []>} : vector<16x64xbf16>, vector<64x128xbf16>, vector<16x128xf32> -> vector<16x128xf32>
    %35 = vector.extract_strided_slice %30 {offsets = [1, 0], sizes = [16, 64], strides = [1, 1]} : vector<18x64xbf16> to vector<16x64xbf16>
    %36 = vector.extract_strided_slice %1 {offsets = [1, 0, 0], sizes = [1, 64, 128], strides = [1, 1, 1]} : vector<3x64x128xbf16> to vector<1x64x128xbf16>
    %37 = vector.shape_cast %36 : vector<1x64x128xbf16> to vector<64x128xbf16>
    %cst_21 = arith.constant dense<0.000000e+00> : vector<16x128xf32>
    %38 = tpu.matmul %35, %37, %cst_21 {dimension_numbers = #tpu.dot_dimension_numbers<[1], [0], [0], [1], [0, 0, 1, 1], [], []>} : vector<16x64xbf16>, vector<64x128xbf16>, vector<16x128xf32> -> vector<16x128xf32>
    %39 = arith.addf %34, %38 : vector<16x128xf32>
    %40 = vector.extract_strided_slice %30 {offsets = [2, 0], sizes = [16, 64], strides = [1, 1]} : vector<18x64xbf16> to vector<16x64xbf16>
    %41 = vector.extract_strided_slice %1 {offsets = [2, 0, 0], sizes = [1, 64, 128], strides = [1, 1, 1]} : vector<3x64x128xbf16> to vector<1x64x128xbf16>
    %42 = vector.shape_cast %41 : vector<1x64x128xbf16> to vector<64x128xbf16>
    %cst_22 = arith.constant dense<0.000000e+00> : vector<16x128xf32>
    %43 = tpu.matmul %40, %42, %cst_22 {dimension_numbers = #tpu.dot_dimension_numbers<[1], [0], [0], [1], [0, 0, 1, 1], [], []>} : vector<16x64xbf16>, vector<64x128xbf16>, vector<16x128xf32> -> vector<16x128xf32>
    %44 = arith.addf %39, %43 : vector<16x128xf32>
    %45 = vector.broadcast %4 : vector<1x128xf32> to vector<16x128xf32>
    %46 = arith.addf %44, %45 : vector<16x128xf32>
    %cst_23 = arith.constant 0.000000e+00 : f32
    %47 = vector.broadcast %cst_23 : f32 to vector<16x128xf32>
    %48 = arith.maximumf %46, %47 : vector<16x128xf32>
    %cst_24 = arith.constant dense<0.000000e+00> : vector<16x128xf32>
    %49 = tpu.matmul %9, %2, %cst_24 {dimension_numbers = #tpu.dot_dimension_numbers<[1], [0], [0], [1], [0, 0, 1, 1], [], []>} : vector<16x64xbf16>, vector<64x128xbf16>, vector<16x128xf32> -> vector<16x128xf32>
    %50 = vector.broadcast %5 : vector<1x128xf32> to vector<16x128xf32>
    %51 = arith.addf %49, %50 : vector<16x128xf32>
    %52 = arith.addf %48, %51 : vector<16x128xf32>
    %c0_25 = arith.constant 0 : index
    %c0_26 = arith.constant 0 : index
    %c0_27 = arith.constant 0 : index
    %53 = vector.load %arg8[%c0_25, %c0_26, %c0_27] : memref<1x16x128xf32, #tpu.memory_space<vmem>>, vector<1x16x128xf32>
    %54 = vector.shape_cast %53 : vector<1x16x128xf32> to vector<16x128xf32>
    %55 = vector.shape_cast %52 : vector<16x128xf32> to vector<1x16x128xf32>
    tpu.vector_store %arg8[%c0_25, %c0_26, %c0_27], %55 {strides = array<i32>} : memref<1x16x128xf32, #tpu.memory_space<vmem>>, vector<1x16x128xf32>,
    return
  }
  func.func @transform_0(%arg0: i32) -> (i32, i32, i32) {
    %c0_i32 = arith.constant 0 : i32
    %c0_i32_0 = arith.constant 0 : i32
    %c0_i32_1 = arith.constant 0 : i32
    return %arg0, %c0_i32, %c0_i32_0 : i32, i32, i32
  }
  func.func @transform_1(%arg0: i32) -> (i32, i32, i32) {
    %c0_i32 = arith.constant 0 : i32
    %c0_i32_0 = arith.constant 0 : i32
    %c0_i32_1 = arith.constant 0 : i32
    %c0_i32_2 = arith.constant 0 : i32
    return %c0_i32, %c0_i32_0, %c0_i32_1 : i32, i32, i32
  }
  func.func @transform_2(%arg0: i32) -> (i32, i32) {
    %c0_i32 = arith.constant 0 : i32
    %c0_i32_0 = arith.constant 0 : i32
    %c0_i32_1 = arith.constant 0 : i32
    return %c0_i32, %c0_i32_0 : i32, i32
  }
  func.func @transform_3(%arg0: i32) -> (i32, i32, i32) {
    %c0_i32 = arith.constant 0 : i32
    %c0_i32_0 = arith.constant 0 : i32
    %c0_i32_1 = arith.constant 0 : i32
    %c0_i32_2 = arith.constant 0 : i32
    return %c0_i32, %c0_i32_0, %c0_i32_1 : i32, i32, i32
  }
  func.func @transform_4(%arg0: i32) -> (i32, i32) {
    %c0_i32 = arith.constant 0 : i32
    %c0_i32_0 = arith.constant 0 : i32
    %c0_i32_1 = arith.constant 0 : i32
    return %c0_i32, %c0_i32_0 : i32, i32
  }
  func.func @transform_5(%arg0: i32) -> (i32, i32) {
    %c0_i32 = arith.constant 0 : i32
    %c0_i32_0 = arith.constant 0 : i32
    %c0_i32_1 = arith.constant 0 : i32
    return %c0_i32, %c0_i32_0 : i32, i32
  }
  func.func @transform_6(%arg0: i32) -> (i32, i32) {
    %c0_i32 = arith.constant 0 : i32
    %c0_i32_0 = arith.constant 0 : i32
    %c0_i32_1 = arith.constant 0 : i32
    return %c0_i32, %c0_i32_0 : i32, i32
  }
  func.func @transform_7(%arg0: i32) -> (i32, i32, i32) {
    %c0_i32 = arith.constant 0 : i32
    %c0_i32_0 = arith.constant 0 : i32
    %c0_i32_1 = arith.constant 0 : i32
    return %arg0, %c0_i32, %c0_i32_0 : i32, i32, i32
  }
}

</mosaic_0001>

<llo_original>
// kernel: tpu_custom_call.1
$region0: #{tpu_custom_call.1}
  #allocation0 [shape = 'u32[]', space=smem, size = 0x4, offset = 0x4, fixed_abs, tag = 'smem constant byte address 0x4 - core index']
  #allocation1 [shape = 'u32[72,128]{1,0:T(1,128)}', space=vmem, size = 0x9000, scoped, tag = 'internal scratch']
  %s0 = inlined_call_operand.hbm [shape: f32[2,16,64], index: 0, kind: input, shape index: {}]
  %s1 = inlined_call_operand.hbm [shape: bf16[3,64,64], index: 1, kind: input, shape index: {}]
  %s2 = inlined_call_operand.vmem [shape: f32[1,64], index: 2, kind: input, shape index: {}]
  %s3 = inlined_call_operand.hbm [shape: bf16[3,64,128], index: 3, kind: input, shape index: {}]
  %s4 = inlined_call_operand.vmem [shape: f32[1,128], index: 4, kind: input, shape index: {}]
  %s5 = inlined_call_operand.hbm [shape: bf16[64,128], index: 5, kind: input, shape index: {}]
  %s6 = inlined_call_operand.vmem [shape: f32[1,128], index: 6, kind: input, shape index: {}]
  %s7 = inlined_call_operand.hbm [shape: f32[2,16,128], index: 7, kind: output, shape index: {}]
  %s8 = sld [smem:[#allocation0]]
  $region77: #{tpu_custom_call.1} parent=0
    _
  %s10 = ssub.s32 1, %s8
  %s11 = scalar_select 0, %s10, %s8
  $region1: #{tpu_custom_call.1} parent=0
    #allocation2 [shape = 'u8[16384]{0}', space=vmem, size = 0x4000, scoped, tag = 'input window, operand 0']
    #allocation3 [shape = 's32[2]{0}', space=sflag, size = 0x8, scoped, tag = 'scoped memory for tpu_custom_call.1']
    #allocation4 [shape = 's32[2]{0}', space=sflag, size = 0x8, scoped, tag = 'scoped memory for tpu_custom_call.1']
    #allocation5 [shape = 'u8[49152]{0}', space=vmem, size = 0xc000, scoped, tag = 'input window, operand 1, single buffered']
    #allocation6 [shape = 's32[1]{0}', space=sflag, size = 0x4, scoped, tag = 'scoped memory for tpu_custom_call.1']
    #allocation7 [shape = 'u8[49152]{0}', space=vmem, size = 0xc000, scoped, tag = 'input window, operand 3, single buffered']
    #allocation8 [shape = 'u8[16384]{0}', space=vmem, size = 0x4000, scoped, tag = 'input window, operand 5, single buffered']
    #allocation9 [shape = 's32[1]{0}', space=sflag, size = 0x4, scoped, tag = 'scoped memory for tpu_custom_call.1']
    #allocation10 [shape = 'u8[16384]{0}', space=vmem, size = 0x4000, scoped, tag = 'output window, operand 0']
    %12 = vsyncpa [#allocation3], 0
    %s13 = scalar_lea.sflag [#allocation3], 1
    %14 = vsyncpa %s13, 0
    %15 = vsyncpa [#allocation6], 0
    %16 = vsyncpa [#allocation9], 0
    %17 = vsyncpa [#allocation4], 0
    %s18 = scalar_lea.sflag [#allocation4], 1
    %19 = vsyncpa %s18, 0
    loop: start=0, step=1, limit=4
    $region2: #{tpu_custom_call.1} parent=1 // loop_pre_header
      _
    $region3: #{tpu_custom_call.1} parent=1 // loop_header
      %s21 = sphi 0, %s25
      %p22 = scmp.ge.s32.totalorder %s21, 4
      %s31 = sphi 0, %s33
      %s34 = sphi 0, %s31
      %s35 = sphi 0, %s34
      %s51 = sphi 0, %s35
      %s55 = sphi 0, %s55
      %s57 = sphi 0, %s55
      %s58 = sphi 0, %s57
      %s72 = sphi 0, %s58
      %s76 = sphi 0, %s76
      %s78 = sphi 0, %s76
      %s79 = sphi 0, %s78
      %s93 = sphi 0, %s79
      %s97 = sphi 0, %s97
      %s99 = sphi 0, %s97
      %s100 = sphi 0, %s99
      %s114 = sphi 0, %s100
      %s118 = sphi 0, %s118
      %s120 = sphi 0, %s118
      %s121 = sphi 0, %s120
      %s135 = sphi 0, %s121
      %s139 = sphi 0, %s139
      %s141 = sphi 0, %s139
      %s142 = sphi 0, %s141
      %s156 = sphi 0, %s142
      %s160 = sphi 0, %s160
      %s162 = sphi 0, %s160
      %s163 = sphi 0, %s162
      %s177 = sphi 0, %s163
      %s183 = sphi 0, %s185
      %s186 = sphi 0, %s183
      %s187 = sphi 0, %s186
      %s203 = sphi 0, %s187
    $region4: #{tpu_custom_call.1} parent=1 // loop_header_branch
      %24 = sbr.rel (%p22) target = $region8
    $region5: #{tpu_custom_call.1} parent=1 // loop_body
      %s26 = ssub.s32 %s21, 1
      %s27 = ssub.s32 %s21, 2
      %s28 = sadd.s32 %s21, 1
      %s29 = ssub.s32 %s21, %s28
      %p30 = scmp.eq.s32.totalorder %s29, 0
      %s32 = sadd.s32 %s31, 1
      %s33 = scalar_select %p30, %s31, %s32
      %p36 = pneg %p30
      %p37 = scmp.eq.s32.totalorder %s21, 1
      %p38 = por %p36, %p37
      %p39 = scmp.ne.s32.totalorder %s31, %s34
      %p40 = scmp.eq.s32.totalorder %s21, 0
      %p41 = por %p39, %p40
      %p42 = scmp.ne.s32.totalorder %s31, %s34
      %p43 = scmp.eq.s32.totalorder %s26, 1
      %p44 = por %p42, %p43
      %p45 = scmp.ne.s32.totalorder %s34, %s35
      %p46 = scmp.eq.s32.totalorder %s26, 0
      %p47 = por %p45, %p46
      %p48 = scmp.ne.s32.totalorder %s34, %s35
      %p49 = scmp.eq.s32.totalorder %s27, 1
      %p50 = por %p48, %p49
      %p52 = scmp.ne.s32.totalorder %s35, %s51
      %p53 = scmp.eq.s32.totalorder %s27, 0
      %p54 = por %p52, %p53
      %s56 = sadd.s32 %s55, 1
      %p59 = scmp.eq.s32.totalorder %s21, 1
      %p60 = scmp.ne.s32.totalorder %s55, %s57
      %p61 = scmp.eq.s32.totalorder %s21, 0
      %p62 = por %p60, %p61
      %p63 = scmp.ne.s32.totalorder %s55, %s57
      %p64 = scmp.eq.s32.totalorder %s26, 1
      %p65 = por %p63, %p64
      %p66 = scmp.ne.s32.totalorder %s57, %s58
      %p67 = scmp.eq.s32.totalorder %s26, 0
      %p68 = por %p66, %p67
      %p69 = scmp.ne.s32.totalorder %s57, %s58
      %p70 = scmp.eq.s32.totalorder %s27, 1
      %p71 = por %p69, %p70
      %p73 = scmp.ne.s32.totalorder %s58, %s72
      %p74 = scmp.eq.s32.totalorder %s27, 0
      %p75 = por %p73, %p74
      %s77 = sadd.s32 %s76, 1
      %p80 = scmp.eq.s32.totalorder %s21, 1
      %p81 = scmp.ne.s32.totalorder %s76, %s78
      %p82 = scmp.eq.s32.totalorder %s21, 0
      %p83 = por %p81, %p82
      %p84 = scmp.ne.s32.totalorder %s76, %s78
      %p85 = scmp.eq.s32.totalorder %s26, 1
      %p86 = por %p84, %p85
      %p87 = scmp.ne.s32.totalorder %s78, %s79
      %p88 = scmp.eq.s32.totalorder %s26, 0
      %p89 = por %p87, %p88
      %p90 = scmp.ne.s32.totalorder %s78, %s79
      %p91 = scmp.eq.s32.totalorder %s27, 1
      %p92 = por %p90, %p91
      %p94 = scmp.ne.s32.totalorder %s79, %s93
      %p95 = scmp.eq.s32.totalorder %s27, 0
      %p96 = por %p94, %p95
      %s98 = sadd.s32 %s97, 1
      %p101 = scmp.eq.s32.totalorder %s21, 1
      %p102 = scmp.ne.s32.totalorder %s97, %s99
      %p103 = scmp.eq.s32.totalorder %s21, 0
      %p104 = por %p102, %p103
      %p105 = scmp.ne.s32.totalorder %s97, %s99
      %p106 = scmp.eq.s32.totalorder %s26, 1
      %p107 = por %p105, %p106
      %p108 = scmp.ne.s32.totalorder %s99, %s100
      %p109 = scmp.eq.s32.totalorder %s26, 0
      %p110 = por %p108, %p109
      %p111 = scmp.ne.s32.totalorder %s99, %s100
      %p112 = scmp.eq.s32.totalorder %s27, 1
      %p113 = por %p111, %p112
      %p115 = scmp.ne.s32.totalorder %s100, %s114
      %p116 = scmp.eq.s32.totalorder %s27, 0
      %p117 = por %p115, %p116
      %s119 = sadd.s32 %s118, 1
      %p122 = scmp.eq.s32.totalorder %s21, 1
      %p123 = scmp.ne.s32.totalorder %s118, %s120
      %p124 = scmp.eq.s32.totalorder %s21, 0
      %p125 = por %p123, %p124
      %p126 = scmp.ne.s32.totalorder %s118, %s120
      %p127 = scmp.eq.s32.totalorder %s26, 1
      %p128 = por %p126, %p127
      %p129 = scmp.ne.s32.totalorder %s120, %s121
      %p130 = scmp.eq.s32.totalorder %s26, 0
      %p131 = por %p129, %p130
      %p132 = scmp.ne.s32.totalorder %s120, %s121
      %p133 = scmp.eq.s32.totalorder %s27, 1
      %p134 = por %p132, %p133
      %p136 = scmp.ne.s32.totalorder %s121, %s135
      %p137 = scmp.eq.s32.totalorder %s27, 0
      %p138 = por %p136, %p137
      %s140 = sadd.s32 %s139, 1
      %p143 = scmp.eq.s32.totalorder %s21, 1
      %p144 = scmp.ne.s32.totalorder %s139, %s141
      %p145 = scmp.eq.s32.totalorder %s21, 0
      %p146 = por %p144, %p145
      %p147 = scmp.ne.s32.totalorder %s139, %s141
      %p148 = scmp.eq.s32.totalorder %s26, 1
      %p149 = por %p147, %p148
      %p150 = scmp.ne.s32.totalorder %s141, %s142
      %p151 = scmp.eq.s32.totalorder %s26, 0
      %p152 = por %p150, %p151
      %p153 = scmp.ne.s32.totalorder %s141, %s142
      %p154 = scmp.eq.s32.totalorder %s27, 1
      %p155 = por %p153, %p154
      %p157 = scmp.ne.s32.totalorder %s142, %s156
      %p158 = scmp.eq.s32.totalorder %s27, 0
      %p159 = por %p157, %p158
      %s161 = sadd.s32 %s160, 1
      %p164 = scmp.eq.s32.totalorder %s21, 1
      %p165 = scmp.ne.s32.totalorder %s160, %s162
      %p166 = scmp.eq.s32.totalorder %s21, 0
      %p167 = por %p165, %p166
      %p168 = scmp.ne.s32.totalorder %s160, %s162
      %p169 = scmp.eq.s32.totalorder %s26, 1
      %p170 = por %p168, %p169
      %p171 = scmp.ne.s32.totalorder %s162, %s163
      %p172 = scmp.eq.s32.totalorder %s26, 0
      %p173 = por %p171, %p172
      %p174 = scmp.ne.s32.totalorder %s162, %s163
      %p175 = scmp.eq.s32.totalorder %s27, 1
      %p176 = por %p174, %p175
      %p178 = scmp.ne.s32.totalorder %s163, %s177
      %p179 = scmp.eq.s32.totalorder %s27, 0
      %p180 = por %p178, %p179
      %s181 = ssub.s32 %s21, %s28
      %p182 = scmp.eq.s32.totalorder %s181, 0
      %s184 = sadd.s32 %s183, 1
      %s185 = scalar_select %p182, %s183, %s184
      %p188 = pneg %p182
      %p189 = scmp.eq.s32.totalorder %s21, 1
      %p190 = por %p188, %p189
      %p191 = scmp.ne.s32.totalorder %s183, %s186
      %p192 = scmp.eq.s32.totalorder %s21, 0
      %p193 = por %p191, %p192
      %p194 = scmp.ne.s32.totalorder %s183, %s186
      %p195 = scmp.eq.s32.totalorder %s26, 1
      %p196 = por %p194, %p195
      %p197 = scmp.ne.s32.totalorder %s186, %s187
      %p198 = scmp.eq.s32.totalorder %s26, 0
      %p199 = por %p197, %p198
      %p200 = scmp.ne.s32.totalorder %s186, %s187
      %p201 = scmp.eq.s32.totalorder %s27, 1
      %p202 = por %p200, %p201
      %p204 = scmp.ne.s32.totalorder %s187, %s203
      %p205 = scmp.eq.s32.totalorder %s27, 0
      %p206 = por %p204, %p205
      %p207 = scmp.le.s32.totalorder 1, %s21
      %p208 = scmp.lt.s32.totalorder %s21, 3
      %p209 = pnand %p207, %p208
      %p210 = pneg %p209
      // Predicated region
      $region9: #{tpu_custom_call.1} parent=5 // pred_check
        _
      $region10: #{tpu_custom_call.1} parent=5 // pred_check_branch
        %212 = sbr.rel (%p209) target = $region12
      $region11: #{tpu_custom_call.1} parent=5 // pred_region
        %s213 = ssub.s32 %s21, 1
        // Predicated region
        $region13: #{tpu_custom_call.1} parent=11 // pred_check
          %p214 = pneg %p68
        $region14: #{tpu_custom_call.1} parent=11 // pred_check_branch
          %216 = sbr.rel (%p214) target = $region16
        $region15: #{tpu_custom_call.1} parent=11 // pred_region
          %218 = vsyncadd [#allocation6], 0
          %s219 = sshll.u32 %s1, 4
          %s220 = int_to_ptr.hbm [resolvable:$true] %s219
          %s221 = sshll.u32 [#allocation5], 4
          %s222 = int_to_ptr.vmem [resolvable:$true] %s221
          %227 = dma.hbm_to_vmem [thread:$0]  %s220, 1536, %s222, [#allocation6], 64, 64, 4
        $region16: #{tpu_custom_call.1} parent=11 // pred_fallthru
          _
        // Predicated region
        $region17: #{tpu_custom_call.1} parent=11 // pred_check
          %p228 = pneg %p89
        $region18: #{tpu_custom_call.1} parent=11 // pred_check_branch
          %230 = sbr.rel (%p228) target = $region20
        $region19: #{tpu_custom_call.1} parent=11 // pred_region
          _
        $region20: #{tpu_custom_call.1} parent=11 // pred_fallthru
          _
        // Predicated region
        $region21: #{tpu_custom_call.1} parent=11 // pred_check
          %p231 = pneg %p110
        $region22: #{tpu_custom_call.1} parent=11 // pred_check_branch
          %233 = sbr.rel (%p231) target = $region24
        $region23: #{tpu_custom_call.1} parent=11 // pred_region
          %235 = vsyncadd [#allocation6], 0
          %s236 = sshll.u32 %s3, 4
          %s237 = int_to_ptr.hbm [resolvable:$true] %s236
          %s238 = sshll.u32 [#allocation7], 4
          %s239 = int_to_ptr.vmem [resolvable:$true] %s238
          %244 = dma.hbm_to_vmem [thread:$0]  %s237, 1536, %s239, [#allocation6], 64, 64, 4
        $region24: #{tpu_custom_call.1} parent=11 // pred_fallthru
          _
        // Predicated region
        $region25: #{tpu_custom_call.1} parent=11 // pred_check
          %p245 = pneg %p131
        $region26: #{tpu_custom_call.1} parent=11 // pred_check_branch
          %247 = sbr.rel (%p245) target = $region28
        $region27: #{tpu_custom_call.1} parent=11 // pred_region
          _
        $region28: #{tpu_custom_call.1} parent=11 // pred_fallthru
          _
        // Predicated region
        $region29: #{tpu_custom_call.1} parent=11 // pred_check
          %p248 = pneg %p152
        $region30: #{tpu_custom_call.1} parent=11 // pred_check_branch
          %250 = sbr.rel (%p248) target = $region32
        $region31: #{tpu_custom_call.1} parent=11 // pred_region
          %252 = vsyncadd [#allocation9], 0
          %s253 = sshll.u32 %s5, 4
          %s254 = int_to_ptr.hbm [resolvable:$true] %s253
          %s255 = sshll.u32 [#allocation8], 4
          %s256 = int_to_ptr.vmem [resolvable:$true] %s255
          %261 = dma.hbm_to_vmem [thread:$0]  %s254, 512, %s256, [#allocation9], 64, 64, 4
        $region32: #{tpu_custom_call.1} parent=11 // pred_fallthru
          _
        // Predicated region
        $region33: #{tpu_custom_call.1} parent=11 // pred_check
          %p262 = pneg %p173
        $region34: #{tpu_custom_call.1} parent=11 // pred_check_branch
          %264 = sbr.rel (%p262) target = $region36
        $region35: #{tpu_custom_call.1} parent=11 // pred_region
          _
        $region36: #{tpu_custom_call.1} parent=11 // pred_fallthru
          _
      $region12: #{tpu_custom_call.1} parent=5 // pred_fallthru
        _
      %p265 = scmp.lt.s32.totalorder %s21, 2
      // Predicated region
      $region37: #{tpu_custom_call.1} parent=5 // pred_check
        %p266 = pneg %p265
      $region38: #{tpu_custom_call.1} parent=5 // pred_check_branch
        %268 = sbr.rel (%p266) target = $region40
      $region39: #{tpu_custom_call.1} parent=5 // pred_region
        // Predicated region
        $region41: #{tpu_custom_call.1} parent=39 // pred_check
          %p269 = pneg %p41
        $region42: #{tpu_custom_call.1} parent=39 // pred_check_branch
          %271 = sbr.rel (%p269) target = $region44
        $region43: #{tpu_custom_call.1} parent=39 // pred_region
          %s272 = sand.u32 %s31, 1
          %s273 = scalar_lea.sflag [#allocation3], %s272
          %s274 = sand.u32 %s31, 1
          %s275 = smul.addr %s274, 16
          %s276 = scalar_lea.vmem [#allocation2], %s275
          %278 = vsyncadd %s273, 0
          %s279 = smul.addr %s21, 2
          %s280 = smul.addr %s279, 8
          %s281 = scalar_lea.hbm %s0, %s280
          %s282 = sshll.u32 %s281, 4
          %s283 = int_to_ptr.hbm [resolvable:$true] %s282
          %s284 = sshll.u32 %s276, 4
          %s285 = int_to_ptr.vmem [resolvable:$true] %s284
          %290 = dma.hbm_to_vmem [thread:$0]  %s283, 256, %s285, %s273, 128, 128, 8
        $region44: #{tpu_custom_call.1} parent=39 // pred_fallthru
          _
      $region40: #{tpu_custom_call.1} parent=5 // pred_fallthru
        _
      %p291 = scmp.le.s32.totalorder 1, %s21
      %p292 = scmp.lt.s32.totalorder %s21, 3
      %p293 = pnand %p291, %p292
      %p294 = pneg %p293
      // Predicated region
      $region45: #{tpu_custom_call.1} parent=5 // pred_check
        _
      $region46: #{tpu_custom_call.1} parent=5 // pred_check_branch
        %296 = sbr.rel (%p293) target = $region48
      $region47: #{tpu_custom_call.1} parent=5 // pred_region
        %s297 = ssub.s32 %s21, 1
        %s298 = sand.u32 %s34, 1
        %s299 = scalar_lea.sflag [#allocation3], %s298
        %s300 = sand.u32 %s34, 1
        %s301 = smul.addr %s300, 16
        %s302 = scalar_lea.vmem [#allocation2], %s301
        // Predicated region
        $region49: #{tpu_custom_call.1} parent=47 // pred_check
          %p303 = pneg %p47
        $region50: #{tpu_custom_call.1} parent=47 // pred_check_branch
          %305 = sbr.rel (%p303) target = $region52
        $region51: #{tpu_custom_call.1} parent=47 // pred_region
          %307 = dma.done %s299, 256
        $region52: #{tpu_custom_call.1} parent=47 // pred_fallthru
          _
        // Predicated region
        $region53: #{tpu_custom_call.1} parent=47 // pred_check
          %p308 = pneg %p68
        $region54: #{tpu_custom_call.1} parent=47 // pred_check_branch
          %310 = sbr.rel (%p308) target = $region56
        $region55: #{tpu_custom_call.1} parent=47 // pred_region
          %312 = dma.done [#allocation6], 1536
        $region56: #{tpu_custom_call.1} parent=47 // pred_fallthru
          _
        // Predicated region
        $region57: #{tpu_custom_call.1} parent=47 // pred_check
          %p313 = pneg %p110
        $region58: #{tpu_custom_call.1} parent=47 // pred_check_branch
          %315 = sbr.rel (%p313) target = $region60
        $region59: #{tpu_custom_call.1} parent=47 // pred_region
          %317 = dma.done [#allocation6], 1536
        $region60: #{tpu_custom_call.1} parent=47 // pred_fallthru
          _
        // Predicated region
        $region61: #{tpu_custom_call.1} parent=47 // pred_check
          %p318 = pneg %p152
        $region62: #{tpu_custom_call.1} parent=47 // pred_check_branch
          %320 = sbr.rel (%p318) target = $region64
        $region63: #{tpu_custom_call.1} parent=47 // pred_region
          %322 = dma.done [#allocation9], 512
        $region64: #{tpu_custom_call.1} parent=47 // pred_fallthru
          _
        %s323 = sand.u32 %s34, 1
        %s324 = scalar_lea.sflag [#allocation3], %s323
        %s325 = sand.u32 %s34, 1
        %s326 = smul.addr %s325, 16
        %s327 = scalar_lea.vmem [#allocation2], %s326
        %p328 = pneg %p47
        %p329 = pneg %p44
        %p330 = pneg %p68
        %p331 = pneg %p65
        %p332 = pneg %p89
        %p333 = pneg %p86
        %p334 = pneg %p110
        %p335 = pneg %p107
        %p336 = pneg %p131
        %p337 = pneg %p128
        %p338 = pneg %p152
        %p339 = pneg %p149
        %p340 = pneg %p173
        %p341 = pneg %p170
        %p342 = pneg %p199
        %p343 = pneg %p196
        %s344 = sand.u32 %s186, 1
        %s345 = scalar_lea.sflag [#allocation4], %s344
        %s346 = sand.u32 %s186, 1
        %s347 = smul.addr %s346, 16
        %s348 = scalar_lea.vmem [#allocation10], %s347
        %v350 = vld [vmem:[#allocation5] sm:$0xf]
        %v351 = vld [vmem:[#allocation5 + $0x4] sm:$0xf]
        %v352 = vld [vmem:[#allocation5 + $0x8] sm:$0xf]
        %v353 = vld [vmem:[#allocation5 + $0xc] sm:$0xf]
        %v354 = vld [vmem:[#allocation5 + $0x10] sm:$0xf]
        %v355 = vld [vmem:[#allocation5 + $0x14] sm:$0xf]
        %v356 = vld [vmem:[#allocation5 + $0x18] sm:$0xf]
        %v357 = vld [vmem:[#allocation5 + $0x1c] sm:$0xf]
        %v358 = vld [vmem:[#allocation5 + $0x20] sm:$0xf]
        %v359 = vld [vmem:[#allocation5 + $0x24] sm:$0xf]
        %v360 = vld [vmem:[#allocation5 + $0x28] sm:$0xf]
        %v361 = vld [vmem:[#allocation5 + $0x2c] sm:$0xf]
        %v362 = vld [vmem:[#allocation5 + $0x30] sm:$0xf]
        %v363 = vld [vmem:[#allocation5 + $0x34] sm:$0xf]
        %v364 = vld [vmem:[#allocation5 + $0x38] sm:$0xf]
        %v365 = vld [vmem:[#allocation5 + $0x3c] sm:$0xf]
        %v366 = vld [vmem:[#allocation5 + $0x40] sm:$0xf]
        %v367 = vld [vmem:[#allocation5 + $0x44] sm:$0xf]
        %v368 = vld [vmem:[#allocation5 + $0x48] sm:$0xf]
        %v369 = vld [vmem:[#allocation5 + $0x4c] sm:$0xf]
        %v370 = vld [vmem:[#allocation5 + $0x50] sm:$0xf]
        %v371 = vld [vmem:[#allocation5 + $0x54] sm:$0xf]
        %v372 = vld [vmem:[#allocation5 + $0x58] sm:$0xf]
        %v373 = vld [vmem:[#allocation5 + $0x5c] sm:$0xf]
        %v374 = vld [vmem:[#allocation7] sm:$0xf]
        %v375 = vld [vmem:[#allocation7 + $0x4] sm:$0xf]
        %v376 = vld [vmem:[#allocation7 + $0x8] sm:$0xf]
        %v377 = vld [vmem:[#allocation7 + $0xc] sm:$0xf]
        %v378 = vld [vmem:[#allocation7 + $0x10] sm:$0xf]
        %v379 = vld [vmem:[#allocation7 + $0x14] sm:$0xf]
        %v380 = vld [vmem:[#allocation7 + $0x18] sm:$0xf]
        %v381 = vld [vmem:[#allocation7 + $0x1c] sm:$0xf]
        %v382 = vld [vmem:[#allocation7 + $0x20] sm:$0xf]
        %v383 = vld [vmem:[#allocation7 + $0x24] sm:$0xf]
        %v384 = vld [vmem:[#allocation7 + $0x28] sm:$0xf]
        %v385 = vld [vmem:[#allocation7 + $0x2c] sm:$0xf]
        %v386 = vld [vmem:[#allocation7 + $0x30] sm:$0xf]
        %v387 = vld [vmem:[#allocation7 + $0x34] sm:$0xf]
        %v388 = vld [vmem:[#allocation7 + $0x38] sm:$0xf]
        %v389 = vld [vmem:[#allocation7 + $0x3c] sm:$0xf]
        %v390 = vld [vmem:[#allocation7 + $0x40] sm:$0xf]
        %v391 = vld [vmem:[#allocation7 + $0x44] sm:$0xf]
        %v392 = vld [vmem:[#allocation7 + $0x48] sm:$0xf]
        %v393 = vld [vmem:[#allocation7 + $0x4c] sm:$0xf]
        %v394 = vld [vmem:[#allocation7 + $0x50] sm:$0xf]
        %v395 = vld [vmem:[#allocation7 + $0x54] sm:$0xf]
        %v396 = vld [vmem:[#allocation7 + $0x58] sm:$0xf]
        %v397 = vld [vmem:[#allocation7 + $0x5c] sm:$0xf]
        %v398 = vld [vmem:[#allocation8] sm:$0xf]
        %v399 = vld [vmem:[#allocation8 + $0x4] sm:$0xf]
        %v400 = vld [vmem:[#allocation8 + $0x8] sm:$0xf]
        %v401 = vld [vmem:[#allocation8 + $0xc] sm:$0xf]
        %v402 = vld [vmem:[#allocation8 + $0x10] sm:$0xf]
        %v403 = vld [vmem:[#allocation8 + $0x14] sm:$0xf]
        %v404 = vld [vmem:[#allocation8 + $0x18] sm:$0xf]
        %v405 = vld [vmem:[#allocation8 + $0x1c] sm:$0xf]
        %v406 = vld [vmem:[%s2] sm:$0x1]
        %v407 = vld [vmem:[%s4] sm:$0x1]
        %v408 = vld [vmem:[%s6] sm:$0x1]
        %v409 = vld [vmem:[%s302] sm:$0xff]
        %v410 = vld [vmem:[%s302 + $0x8] sm:$0xff]
        %v411 = vpack.c.bf16 %v409, %v409
        %v412 = vpack.c.bf16 %v410, %v410
        %v415 = vunpack.c.l.b16 %v411
        %v416 = vunpack.c.l.b16 %v412
        %v417 = vpack.c.b16 %v416, %v415
        %v419 = vshrl.u32 %v417, 16
        %v421 = vrot.slane %v419, 7
        %v422 = vshll.u32 %v417, 16
        %v424 = vor.u32 %v421, %v422
        %vm427 = vcmask 1040384
        %vm428 = vsmask.f32 256
        %vm429 = vmand %vm427, %vm428
        %v430 = vsel %vm429, 0, %v424
        %v431 = vsel %vm429, %v421, 0
        %vm432 = vsmask.f32 7424
        %v434 = vshrl.u32 %v430, 16
        %v436 = vshll.u32 %v430, 16
        %v438 = vrot.slane %v436, 1
        %v439 = vor.u32 %v434, %v438
        %v441 = vshll.u32 %v431, 16
        %v443 = vrot.slane %v441, 1
        %v444 = vsel %vm432, %v439, %v443
        %v453 = vunpack.c.l.b16 %v358
        %v454 = vunpack.c.l.b16 %v359
        %v455 = vunpack.c.l.b16 %v360
        %v456 = vunpack.c.l.b16 %v361
        %v457 = vunpack.c.l.b16 %v362
        %v458 = vunpack.c.l.b16 %v363
        %v459 = vunpack.c.l.b16 %v364
        %v460 = vunpack.c.l.b16 %v365
        %v461 = vpack.c.b16 %v454, %v453
        %v462 = vpack.c.b16 %v456, %v455
        %v463 = vpack.c.b16 %v458, %v457
        %v464 = vpack.c.b16 %v460, %v459
        %vm469 = vcmask 523264
        %v471 = vsel %vm469, %v444, 0
        %473 = vmatpush.bf16.msra.mxu0 0
        %474 = vmatpush.bf16.msra.mxu0 0
        %475 = vmatpush.bf16.msra.mxu0 0
        %476 = vmatpush.bf16.msra.mxu0 0
        %477 = vmatpush.bf16.msra.mxu0 %v464
        %478 = vmatpush.bf16.msra.mxu0 %v463
        %479 = vmatpush.bf16.msra.mxu0 %v462
        %480 = vmatpush.bf16.msra.mxu0 %v461
        %481 = vmatmul.bf16.gmra.mxu0 %v471
        %v482 = vpop.f32.mrf.mxu0
        %v483 = vadd.f32 0.0, %v482
        %v484 = vpop.f32.mrf.mxu0
        %v485 = vadd.f32 0.0, %v484
        %486 = vdwg.mxu0
        %v495 = vunpack.c.l.b16 %v350
        %v496 = vunpack.c.l.b16 %v351
        %v497 = vunpack.c.l.b16 %v352
        %v498 = vunpack.c.l.b16 %v353
        %v499 = vunpack.c.l.b16 %v354
        %v500 = vunpack.c.l.b16 %v355
        %v501 = vunpack.c.l.b16 %v356
        %v502 = vunpack.c.l.b16 %v357
        %v503 = vpack.c.b16 %v496, %v495
        %v504 = vpack.c.b16 %v498, %v497
        %v505 = vpack.c.b16 %v500, %v499
        %v506 = vpack.c.b16 %v502, %v501
        %v511 = vsel %vm469, %v430, 0
        %513 = vmatpush.bf16.msra.mxu0 0
        %514 = vmatpush.bf16.msra.mxu0 0
        %515 = vmatpush.bf16.msra.mxu0 0
        %516 = vmatpush.bf16.msra.mxu0 0
        %517 = vmatpush.bf16.msra.mxu0 %v506
        %518 = vmatpush.bf16.msra.mxu0 %v505
        %519 = vmatpush.bf16.msra.mxu0 %v504
        %520 = vmatpush.bf16.msra.mxu0 %v503
        %521 = vmatmul.bf16.gmra.mxu0 %v511
        %v522 = vpop.f32.mrf.mxu0
        %v523 = vadd.f32 %v483, %v522
        %v524 = vpop.f32.mrf.mxu0
        %v525 = vadd.f32 %v485, %v524
        %526 = vdwg.mxu0
        %vm529 = vcmask 1046528
        %v530 = vrot.slane %v430, 1
        %v531 = vrot.slane %v431, 1
        %v532 = vsel %vm529, %v530, %v531
        %v541 = vunpack.c.l.b16 %v366
        %v542 = vunpack.c.l.b16 %v367
        %v543 = vunpack.c.l.b16 %v368
        %v544 = vunpack.c.l.b16 %v369
        %v545 = vunpack.c.l.b16 %v370
        %v546 = vunpack.c.l.b16 %v371
        %v547 = vunpack.c.l.b16 %v372
        %v548 = vunpack.c.l.b16 %v373
        %v549 = vpack.c.b16 %v542, %v541
        %v550 = vpack.c.b16 %v544, %v543
        %v551 = vpack.c.b16 %v546, %v545
        %v552 = vpack.c.b16 %v548, %v547
        %v558 = vsel %vm469, %v532, 0
        %560 = vmatpush.bf16.msra.mxu0 0
        %561 = vmatpush.bf16.msra.mxu0 0
        %562 = vmatpush.bf16.msra.mxu0 0
        %563 = vmatpush.bf16.msra.mxu0 0
        %564 = vmatpush.bf16.msra.mxu0 %v552
        %565 = vmatpush.bf16.msra.mxu0 %v551
        %566 = vmatpush.bf16.msra.mxu0 %v550
        %567 = vmatpush.bf16.msra.mxu0 %v549
        %568 = vmatmul.bf16.gmra.mxu0 %v558
        %v569 = vpop.f32.mrf.mxu0
        %v570 = vadd.f32 0.0, %v569
        %v571 = vpop.f32.mrf.mxu0
        %v572 = vadd.f32 0.0, %v571
        %573 = vdwg.mxu0
        %v574 = vadd.f32 %v523, %v570
        %v575 = vadd.f32 %v525, %v572
        %v577 = vperm.slane %v406, 0
        %v579 = vadd.f32 %v574, %v577
        %v580 = vadd.f32 %v575, %v577
        %v581 = vmax.f32 %v579, 0.0
        %v582 = vmax.f32 %v580, 0.0
        %v583 = vpack.c.bf16 %v581, %v581
        %v584 = vpack.c.bf16 %v582, %v582
        %v587 = vunpack.c.l.b16 %v583
        %v588 = vunpack.c.l.b16 %v584
        %v589 = vpack.c.b16 %v588, %v587
        %v591 = vshrl.u32 %v589, 16
        %v593 = vrot.slane %v591, 7
        %v594 = vshll.u32 %v589, 16
        %v596 = vor.u32 %v593, %v594
        %v599 = vsel %vm429, 0, %v596
        %v600 = vsel %vm429, %v593, 0
        %v602 = vshrl.u32 %v599, 16
        %v604 = vshll.u32 %v599, 16
        %v606 = vrot.slane %v604, 1
        %v607 = vor.u32 %v602, %v606
        %v609 = vshll.u32 %v600, 16
        %v611 = vrot.slane %v609, 1
        %v612 = vsel %vm432, %v607, %v611
        %v621 = vunpack.c.l.b16 %v382
        %v622 = vunpack.c.l.b16 %v383
        %v623 = vunpack.c.l.b16 %v384
        %v624 = vunpack.c.l.b16 %v385
        %v625 = vunpack.c.l.b16 %v386
        %v626 = vunpack.c.l.b16 %v387
        %v627 = vunpack.c.l.b16 %v388
        %v628 = vunpack.c.l.b16 %v389
        %v629 = vpack.c.b16 %v622, %v621
        %v630 = vpack.c.b16 %v624, %v623
        %v631 = vpack.c.b16 %v626, %v625
        %v632 = vpack.c.b16 %v628, %v627
        %v638 = vsel %vm469, %v612, 0
        %640 = vmatpush.bf16.msra.mxu0 0
        %641 = vmatpush.bf16.msra.mxu0 0
        %642 = vmatpush.bf16.msra.mxu0 0
        %643 = vmatpush.bf16.msra.mxu0 0
        %644 = vmatpush.bf16.msra.mxu0 %v632
        %645 = vmatpush.bf16.msra.mxu0 %v631
        %646 = vmatpush.bf16.msra.mxu0 %v630
        %647 = vmatpush.bf16.msra.mxu0 %v629
        %648 = vmatmul.bf16.gmra.mxu0 %v638
        %v649 = vpop.f32.mrf.mxu0
        %v650 = vadd.f32 0.0, %v649
        %v651 = vpop.f32.mrf.mxu0
        %v652 = vadd.f32 0.0, %v651
        %653 = vdwg.mxu0
        %v662 = vunpack.c.l.b16 %v374
        %v663 = vunpack.c.l.b16 %v375
        %v664 = vunpack.c.l.b16 %v376
        %v665 = vunpack.c.l.b16 %v377
        %v666 = vunpack.c.l.b16 %v378
        %v667 = vunpack.c.l.b16 %v379
        %v668 = vunpack.c.l.b16 %v380
        %v669 = vunpack.c.l.b16 %v381
        %v670 = vpack.c.b16 %v663, %v662
        %v671 = vpack.c.b16 %v665, %v664
        %v672 = vpack.c.b16 %v667, %v666
        %v673 = vpack.c.b16 %v669, %v668
        %v678 = vsel %vm469, %v599, 0
        %680 = vmatpush.bf16.msra.mxu0 0
        %681 = vmatpush.bf16.msra.mxu0 0
        %682 = vmatpush.bf16.msra.mxu0 0
        %683 = vmatpush.bf16.msra.mxu0 0
        %684 = vmatpush.bf16.msra.mxu0 %v673
        %685 = vmatpush.bf16.msra.mxu0 %v672
        %686 = vmatpush.bf16.msra.mxu0 %v671
        %687 = vmatpush.bf16.msra.mxu0 %v670
        %688 = vmatmul.bf16.gmra.mxu0 %v678
        %v689 = vpop.f32.mrf.mxu0
        %v690 = vadd.f32 %v650, %v689
        %v691 = vpop.f32.mrf.mxu0
        %v692 = vadd.f32 %v652, %v691
        %693 = vdwg.mxu0
        %v696 = vrot.slane %v599, 1
        %v697 = vrot.slane %v600, 1
        %v698 = vsel %vm529, %v696, %v697
        %v707 = vunpack.c.l.b16 %v390
        %v708 = vunpack.c.l.b16 %v391
        %v709 = vunpack.c.l.b16 %v392
        %v710 = vunpack.c.l.b16 %v393
        %v711 = vunpack.c.l.b16 %v394
        %v712 = vunpack.c.l.b16 %v395
        %v713 = vunpack.c.l.b16 %v396
        %v714 = vunpack.c.l.b16 %v397
        %v715 = vpack.c.b16 %v708, %v707
        %v716 = vpack.c.b16 %v710, %v709
        %v717 = vpack.c.b16 %v712, %v711
        %v718 = vpack.c.b16 %v714, %v713
        %v724 = vsel %vm469, %v698, 0
        %726 = vmatpush.bf16.msra.mxu0 0
        %727 = vmatpush.bf16.msra.mxu0 0
        %728 = vmatpush.bf16.msra.mxu0 0
        %729 = vmatpush.bf16.msra.mxu0 0
        %730 = vmatpush.bf16.msra.mxu0 %v718
        %731 = vmatpush.bf16.msra.mxu0 %v717
        %732 = vmatpush.bf16.msra.mxu0 %v716
        %733 = vmatpush.bf16.msra.mxu0 %v715
        %734 = vmatmul.bf16.gmra.mxu0 %v724
        %v735 = vpop.f32.mrf.mxu0
        %v736 = vadd.f32 0.0, %v735
        %v737 = vpop.f32.mrf.mxu0
        %v738 = vadd.f32 0.0, %v737
        %739 = vdwg.mxu0
        %v740 = vadd.f32 %v690, %v736
        %v741 = vadd.f32 %v692, %v738
        %v743 = vperm.slane %v407, 0
        %v745 = vadd.f32 %v740, %v743
        %v746 = vadd.f32 %v741, %v743
        %v747 = vmax.f32 %v745, 0.0
        %v748 = vmax.f32 %v746, 0.0
        %v750 = vperm.slane %v408, 0
        %v760 = vunpack.c.l.b16 %v398
        %v761 = vunpack.c.l.b16 %v399
        %v762 = vunpack.c.l.b16 %v400
        %v763 = vunpack.c.l.b16 %v401
        %v764 = vunpack.c.l.b16 %v402
        %v765 = vunpack.c.l.b16 %v403
        %v766 = vunpack.c.l.b16 %v404
        %v767 = vunpack.c.l.b16 %v405
        %v768 = vpack.c.b16 %v761, %v760
        %v769 = vpack.c.b16 %v763, %v762
        %v770 = vpack.c.b16 %v765, %v764
        %v771 = vpack.c.b16 %v767, %v766
        %v776 = vsel %vm469, %v417, 0
        %778 = vmatpush.bf16.msra.mxu0 0
        %779 = vmatpush.bf16.msra.mxu0 0
        %780 = vmatpush.bf16.msra.mxu0 0
        %781 = vmatpush.bf16.msra.mxu0 0
        %782 = vmatpush.bf16.msra.mxu0 %v771
        %783 = vmatpush.bf16.msra.mxu0 %v770
        %784 = vmatpush.bf16.msra.mxu0 %v769
        %785 = vmatpush.bf16.msra.mxu0 %v768
        %786 = vmatmul.bf16.gmra.mxu0 %v776
        %v787 = vpop.f32.mrf.mxu0
        %v788 = vadd.f32 %v750, %v787
        %v789 = vpop.f32.mrf.mxu0
        %v790 = vadd.f32 %v750, %v789
        %791 = vdwg.mxu0
        %v792 = vadd.f32 %v747, %v788
        %v793 = vadd.f32 %v748, %v790
        %794 = vst [vmem:[%s348] sm:$0xff] %v792
        %795 = vst [vmem:[%s348 + $0x8] sm:$0xff] %v793
        %s796 = sand.u32 %s186, 1
        %s797 = scalar_lea.sflag [#allocation4], %s796
        %s798 = sand.u32 %s186, 1
        %s799 = smul.addr %s798, 16
        %s800 = scalar_lea.vmem [#allocation10], %s799
        // Predicated region
        $region65: #{tpu_custom_call.1} parent=47 // pred_check
          %p801 = pneg %p196
        $region66: #{tpu_custom_call.1} parent=47 // pred_check_branch
          %803 = sbr.rel (%p801) target = $region68
        $region67: #{tpu_custom_call.1} parent=47 // pred_region
          %805 = vsyncadd %s797, 0
          %s806 = smul.addr %s26, 2
          %s807 = smul.addr %s806, 8
          %s808 = scalar_lea.hbm %s7, %s807
          %s809 = sshll.u32 %s800, 4
          %s810 = int_to_ptr.vmem [resolvable:$true] %s809
          %s811 = sshll.u32 %s808, 4
          %s812 = int_to_ptr.hbm [resolvable:$true] %s811
          %817 = dma.vmem_to_hbm [thread:$0]  %s810, 256, %s812, %s797, 128, 128, 8
        $region68: #{tpu_custom_call.1} parent=47 // pred_fallthru
          _
      $region48: #{tpu_custom_call.1} parent=5 // pred_fallthru
        _
      %p818 = scmp.le.s32.totalorder 2, %s21
      // Predicated region
      $region69: #{tpu_custom_call.1} parent=5 // pred_check
        %p819 = pneg %p818
      $region70: #{tpu_custom_call.1} parent=5 // pred_check_branch
        %821 = sbr.rel (%p819) target = $region72
      $region71: #{tpu_custom_call.1} parent=5 // pred_region
        %s822 = ssub.s32 %s21, 2
        // Predicated region
        $region73: #{tpu_custom_call.1} parent=71 // pred_check
          %p823 = pneg %p202
        $region74: #{tpu_custom_call.1} parent=71 // pred_check_branch
          %825 = sbr.rel (%p823) target = $region76
        $region75: #{tpu_custom_call.1} parent=71 // pred_region
          %s826 = sand.u32 %s187, 1
          %s827 = scalar_lea.sflag [#allocation4], %s826
          %s828 = sand.u32 %s187, 1
          %s829 = smul.addr %s828, 16
          %s830 = scalar_lea.vmem [#allocation10], %s829
          %832 = dma.done %s827, 256
        $region76: #{tpu_custom_call.1} parent=71 // pred_fallthru
          _
      $region72: #{tpu_custom_call.1} parent=5 // pred_fallthru
        _
    $region6: #{tpu_custom_call.1} parent=1 // loop_footer
      %s25 = sadd.s32 1, %s21
    $region7: #{tpu_custom_call.1} parent=1 // loop_footer_branch
      %20 = sbr.rel target = $region3
    $region8: #{tpu_custom_call.1} parent=1 // loop_exit
      _
    %833 = vsyncpa [#allocation3], 1
    %s834 = scalar_lea.sflag [#allocation3], 1
    %835 = vsyncpa %s834, 1
    %836 = vsyncpa [#allocation6], 1
    %837 = vsyncpa [#allocation9], 1
    %838 = vsyncpa [#allocation4], 1
    %s839 = scalar_lea.sflag [#allocation4], 1
    %840 = vsyncpa %s839, 1

</llo_original>
